<compile_context>
chip_gen: v5e
topology: v5e:2x2
jax: 0.10.0
libtpu: 0.0.40
codegen_flags: <defaults>
</compile_context>

<pallas_src>
import functools

import jax
import jax.numpy as jnp
from jax.experimental import pallas as pl
from jax.experimental.pallas import tpu as pltpu


def _gelu_tanh(x):
    # tanh-approximate GELU; tanh goes to the EUP slot (free w.r.t. VALU).
    c = 0.7978845608028654  # sqrt(2/pi)
    return 0.5 * x * (1.0 + jnp.tanh(c * (x + 0.044715 * x * x * x)))


def _mlp_kernel(x_ref, w1_ref, b1_ref, w2_ref, b2_ref, o_ref):
    # x_ref : (C_in, T)      w1_ref: (hidden, C_in)   b1_ref: (hidden, 1)  f32
    # w2_ref: (C_out, hidden) b2_ref: (C_out, 1) f32  o_ref : (C_out, T)
    x = x_ref[...]                                              # stay in input dtype
    # fc1: channel contraction on the MXU, f32 accumulation
    h = jnp.dot(w1_ref[...], x, preferred_element_type=jnp.float32)
    h = h + b1_ref[...]                                         # broadcast (hidden,1)
    h = _gelu_tanh(h)                                           # f32 activation
    # fc2: back to compute dtype for the MXU, f32 accumulation
    y = jnp.dot(w2_ref[...], h.astype(w2_ref.dtype),
                preferred_element_type=jnp.float32)
    y = y + b2_ref[...]
    o_ref[...] = y.astype(o_ref.dtype)


def _choose_tile_hw(hw, c_in, c_out, hidden, elem_bytes, budget_bytes=24 << 20):
    """Largest lane-dense (multiple of 128) HW tile whose working set fits the budget."""
    hw_pad128 = ((hw + 127) // 128) * 128
    tile = 128
    for cand in (2048, 1536, 1024, 768, 512, 384, 256, 128):
        # double-buffered input + output slabs + f32 hidden intermediate
        need = 2 * (c_in + c_out) * cand * elem_bytes + hidden * cand * 4
        if need <= budget_bytes:
            tile = cand
            break
    return min(tile, hw_pad128)


@functools.partial(jax.jit, static_argnames=())
def mlp_forward(x, fc1_w, fc1_b, fc2_w, fc2_b):
    """x: (B, C_in, H, W); fc1_w: (hidden, C_in, 1, 1); fc1_b: (hidden,);
       fc2_w: (C_out, hidden, 1, 1); fc2_b: (C_out,).  Returns (B, C_out, H, W)."""
    B, C_in, H, W = x.shape
    hidden = fc1_w.shape[0]
    C_out = fc2_w.shape[0]
    HW = H * W

    elem_bytes = jnp.dtype(x.dtype).itemsize
    tile = _choose_tile_hw(HW, C_in, C_out, hidden, elem_bytes)
    hw_pad = pl.cdiv(HW, tile) * tile

    x_flat = x.reshape(B, C_in, HW)
    if hw_pad != HW:
        # pad to a multiple of the tile so every output block is lane-dense (no masked stores)
        x_flat = jnp.pad(x_flat, ((0, 0), (0, 0), (0, hw_pad - HW)))

    w1 = fc1_w.reshape(hidden, C_in).astype(x.dtype)
    b1 = fc1_b.reshape(hidden, 1).astype(jnp.float32)
    w2 = fc2_w.reshape(C_out, hidden).astype(x.dtype)
    b2 = fc2_b.reshape(C_out, 1).astype(jnp.float32)

    grid = (B, hw_pad // tile)

    out_flat = pl.pallas_call(
        _mlp_kernel,
        out_shape=jax.ShapeDtypeStruct((B, C_out, hw_pad), x.dtype),
        grid_spec=pltpu.PrefetchScalarGridSpec(
            num_scalar_prefetch=0,
            grid=grid,
            in_specs=[
                pl.BlockSpec((pl.Squeezed(), C_in, tile), lambda b, t: (b, 0, t)),
                pl.BlockSpec((hidden, C_in), lambda b, t: (0, 0)),
                pl.BlockSpec((hidden, 1), lambda b, t: (0, 0)),
                pl.BlockSpec((C_out, hidden), lambda b, t: (0, 0)),
                pl.BlockSpec((C_out, 1), lambda b, t: (0, 0)),
            ],
            out_specs=pl.BlockSpec((pl.Squeezed(), C_out, tile),
                                   lambda b, t: (b, 0, t)),
        ),
        compiler_params=pltpu.CompilerParams(
            dimension_semantics=("parallel", "parallel"),
            vmem_limit_bytes=48 * 1024 * 1024,
        ),
    )(x_flat, w1, b1, w2, b2)

    if hw_pad != HW:
        out_flat = out_flat[:, :, :HW]
    return out_flat.reshape(B, C_out, H, W)


def mlp_reference(x, fc1_w, fc1_b, fc2_w, fc2_b):
    """Pure-JAX reference of the PyTorch Mlp forward (dropout p=0.0 -> identity)."""
    B, C_in, H, W = x.shape
    hidden = fc1_w.shape[0]
    C_out = fc2_w.shape[0]
    xf = x.astype(jnp.float32).reshape(B, C_in, H * W)
    h = jnp.einsum("oc,bcs->bos", fc1_w.reshape(hidden, C_in).astype(jnp.float32), xf)
    h = h + fc1_b.reshape(1, hidden, 1).astype(jnp.float32)
    h = _gelu_tanh(h)
    y = jnp.einsum("oh,bhs->bos", fc2_w.reshape(C_out, hidden).astype(jnp.float32), h)
    y = y + fc2_b.reshape(1, C_out, 1).astype(jnp.float32)
    return y.reshape(B, C_out, H, W).astype(x.dtype)


if __name__ == "__main__":
    key = jax.random.PRNGKey(0)
    B, C, H, W = 2, 4, 16, 16
    hidden = 32
    C_out = C  # out_features defaults to in_features

    kx, kw1, kb1, kw2, kb2 = jax.random.split(key, 5)
    x = jax.random.normal(kx, (B, C, H, W), dtype=jnp.float32)

    bound1 = 1.0 / (C ** 0.5)
    fc1_w = jax.random.uniform(kw1, (hidden, C, 1, 1), minval=-bound1, maxval=bound1,
                               dtype=jnp.float32)
    fc1_b = jax.random.uniform(kb1, (hidden,), minval=-bound1, maxval=bound1,
                               dtype=jnp.float32)
    bound2 = 1.0 / (hidden ** 0.5)
    fc2_w = jax.random.uniform(kw2, (C_out, hidden, 1, 1), minval=-bound2, maxval=bound2,
                               dtype=jnp.float32)
    fc2_b = jax.random.uniform(kb2, (C_out,), minval=-bound2, maxval=bound2,
                               dtype=jnp.float32)

    out = mlp_forward(x, fc1_w, fc1_b, fc2_w, fc2_b)
    out = jax.block_until_ready(out)

    ref = mlp_reference(x, fc1_w, fc1_b, fc2_w, fc2_b)
    assert out.shape == (B, C_out, H, W)
    assert jnp.allclose(out, ref, atol=1e-4, rtol=1e-4), "mismatch vs reference"

    print("KERNEL_OK")
</pallas_src>

<mosaic_0001>
module attributes {stable_mosaic.version = 11 : i64} {
  func.func @_mlp_kernel(%arg0: i32, %arg1: i32, %arg2: memref<1x4x256xf32, #tpu.memory_space<vmem>>, %arg3: memref<32x4xf32, #tpu.memory_space<vmem>>, %arg4: memref<32x1xf32, #tpu.memory_space<vmem>>, %arg5: memref<4x32xf32, #tpu.memory_space<vmem>>, %arg6: memref<4x1xf32, #tpu.memory_space<vmem>>, %arg7: memref<1x4x256xf32, #tpu.memory_space<vmem>>) attributes {dimension_semantics = [#tpu.dimension_semantics<parallel>, #tpu.dimension_semantics<parallel>], iteration_bounds = array<i64: 2, 1>, scalar_prefetch = 0 : i64, scratch_operands = 0 : i64, tpu.core_type = #tpu.core_type<tc>, window_params = [{transform_indices = @transform_0, window_bounds = array<i64: 1, 4, 256>}, {pipeline_mode = #tpu.pipeline_mode<synchronous>, transform_indices = @transform_1, window_bounds = array<i64: 32, 4>}, {pipeline_mode = #tpu.pipeline_mode<synchronous>, transform_indices = @transform_2, window_bounds = array<i64: 32, 1>}, {pipeline_mode = #tpu.pipeline_mode<synchronous>, transform_indices = @transform_3, window_bounds = array<i64: 4, 32>}, {pipeline_mode = #tpu.pipeline_mode<synchronous>, transform_indices = @transform_4, window_bounds = array<i64: 4, 1>}, {transform_indices = @transform_5, window_bounds = array<i64: 1, 4, 256>}]} {
    %c0 = arith.constant 0 : index
    %c0_0 = arith.constant 0 : index
    %c0_1 = arith.constant 0 : index
    %0 = vector.load %arg2[%c0, %c0_0, %c0_1] : memref<1x4x256xf32, #tpu.memory_space<vmem>>, vector<1x4x256xf32>
    %1 = vector.shape_cast %0 : vector<1x4x256xf32> to vector<4x256xf32>
    %c0_2 = arith.constant 0 : index
    %c0_3 = arith.constant 0 : index
    %2 = vector.load %arg3[%c0_2, %c0_3] : memref<32x4xf32, #tpu.memory_space<vmem>>, vector<32x4xf32>
    %cst = arith.constant dense<0.000000e+00> : vector<32x256xf32>
    %3 = tpu.matmul %2, %1, %cst {dimension_numbers = #tpu.dot_dimension_numbers<[1], [0], [0], [1], [0, 0, 1, 1], [], []>} : vector<32x4xf32>, vector<4x256xf32>, vector<32x256xf32> -> vector<32x256xf32>
    %c0_4 = arith.constant 0 : index
    %c0_5 = arith.constant 0 : index
    %4 = vector.load %arg4[%c0_4, %c0_5] : memref<32x1xf32, #tpu.memory_space<vmem>>, vector<32x1xf32>
    %5 = vector.broadcast %4 : vector<32x1xf32> to vector<32x256xf32>
    %6 = arith.addf %3, %5 : vector<32x256xf32>
    %cst_6 = arith.constant 5.000000e-01 : f32
    %7 = vector.broadcast %cst_6 : f32 to vector<32x256xf32>
    %8 = arith.mulf %7, %6 : vector<32x256xf32>
    %cst_7 = arith.constant 4.471500e-02 : f32
    %9 = vector.broadcast %cst_7 : f32 to vector<32x256xf32>
    %10 = arith.mulf %9, %6 : vector<32x256xf32>
    %11 = arith.mulf %10, %6 : vector<32x256xf32>
    %12 = arith.mulf %11, %6 : vector<32x256xf32>
    %13 = arith.addf %6, %12 : vector<32x256xf32>
    %cst_8 = arith.constant 0.797884583 : f32
    %14 = vector.broadcast %cst_8 : f32 to vector<32x256xf32>
    %15 = arith.mulf %14, %13 : vector<32x256xf32>
    %16 = math.tanh %15 : vector<32x256xf32>
    %cst_9 = arith.constant 1.000000e+00 : f32
    %17 = vector.broadcast %cst_9 : f32 to vector<32x256xf32>
    %18 = arith.addf %17, %16 : vector<32x256xf32>
    %19 = arith.mulf %8, %18 : vector<32x256xf32>
    %c0_10 = arith.constant 0 : index
    %c0_11 = arith.constant 0 : index
    %20 = vector.load %arg5[%c0_10, %c0_11] : memref<4x32xf32, #tpu.memory_space<vmem>>, vector<4x32xf32>
    %cst_12 = arith.constant dense<0.000000e+00> : vector<4x256xf32>
    %21 = tpu.matmul %20, %19, %cst_12 {dimension_numbers = #tpu.dot_dimension_numbers<[1], [0], [0], [1], [0, 0, 1, 1], [], []>} : vector<4x32xf32>, vector<32x256xf32>, vector<4x256xf32> -> vector<4x256xf32>
    %c0_13 = arith.constant 0 : index
    %c0_14 = arith.constant 0 : index
    %22 = vector.load %arg6[%c0_13, %c0_14] : memref<4x1xf32, #tpu.memory_space<vmem>>, vector<4x1xf32>
    %23 = vector.broadcast %22 : vector<4x1xf32> to vector<4x256xf32>
    %24 = arith.addf %21, %23 : vector<4x256xf32>
    %c0_15 = arith.constant 0 : index
    %c0_16 = arith.constant 0 : index
    %c0_17 = arith.constant 0 : index
    %25 = vector.load %arg7[%c0_15, %c0_16, %c0_17] : memref<1x4x256xf32, #tpu.memory_space<vmem>>, vector<1x4x256xf32>
    %26 = vector.shape_cast %25 : vector<1x4x256xf32> to vector<4x256xf32>
    %27 = vector.shape_cast %24 : vector<4x256xf32> to vector<1x4x256xf32>
    tpu.vector_store %arg7[%c0_15, %c0_16, %c0_17], %27 {strides = array<i32>} : memref<1x4x256xf32, #tpu.memory_space<vmem>>, vector<1x4x256xf32>,
    return
  }
  func.func @transform_0(%arg0: i32, %arg1: i32) -> (i32, i32, i32) {
    %c0_i32 = arith.constant 0 : i32
    %c0_i32_0 = arith.constant 0 : i32
    return %arg0, %c0_i32, %arg1 : i32, i32, i32
  }
  func.func @transform_1(%arg0: i32, %arg1: i32) -> (i32, i32) {
    %c0_i32 = arith.constant 0 : i32
    %c0_i32_0 = arith.constant 0 : i32
    %c0_i32_1 = arith.constant 0 : i32
    return %c0_i32, %c0_i32_0 : i32, i32
  }
  func.func @transform_2(%arg0: i32, %arg1: i32) -> (i32, i32) {
    %c0_i32 = arith.constant 0 : i32
    %c0_i32_0 = arith.constant 0 : i32
    %c0_i32_1 = arith.constant 0 : i32
    return %c0_i32, %c0_i32_0 : i32, i32
  }
  func.func @transform_3(%arg0: i32, %arg1: i32) -> (i32, i32) {
    %c0_i32 = arith.constant 0 : i32
    %c0_i32_0 = arith.constant 0 : i32
    %c0_i32_1 = arith.constant 0 : i32
    return %c0_i32, %c0_i32_0 : i32, i32
  }
  func.func @transform_4(%arg0: i32, %arg1: i32) -> (i32, i32) {
    %c0_i32 = arith.constant 0 : i32
    %c0_i32_0 = arith.constant 0 : i32
    %c0_i32_1 = arith.constant 0 : i32
    return %c0_i32, %c0_i32_0 : i32, i32
  }
  func.func @transform_5(%arg0: i32, %arg1: i32) -> (i32, i32, i32) {
    %c0_i32 = arith.constant 0 : i32
    %c0_i32_0 = arith.constant 0 : i32
    return %arg0, %c0_i32, %arg1 : i32, i32, i32
  }
}

</mosaic_0001>

<llo_original>
// kernel: mlp_forward.1
$region0: #{mlp_forward.1}
  #allocation0 [shape = 'u32[]', space=smem, size = 0x4, offset = 0x4, fixed_abs, tag = 'smem constant byte address 0x4 - core index']
  #allocation1 [shape = 'u32[72,128]{1,0:T(1,128)}', space=vmem, size = 0x9000, scoped, tag = 'internal scratch']
  %s0 = inlined_call_operand.vmem [shape: f32[2,4,256], index: 0, kind: input, shape index: {}]
  %s1 = inlined_call_operand.vmem [shape: f32[32,4], index: 1, kind: input, shape index: {}]
  %s2 = inlined_call_operand.vmem [shape: f32[32,1], index: 2, kind: input, shape index: {}]
  %s3 = inlined_call_operand.vmem [shape: f32[4,32], index: 3, kind: input, shape index: {}]
  %s4 = inlined_call_operand.vmem [shape: f32[4,1], index: 4, kind: input, shape index: {}]
  %s5 = inlined_call_operand.vmem [shape: f32[2,4,256], index: 5, kind: output, shape index: {}]
  %s6 = sld [smem:[#allocation0]]
  $region53: #{mlp_forward.1} parent=0
    _
  %s8 = ssub.s32 1, %s6
  %s9 = scalar_select 0, %s8, %s6
  loop: start=0, step=1, limit=4
  $region2: #{mlp_forward.1} parent=0 // loop_pre_header
    _
  $region3: #{mlp_forward.1} parent=0 // loop_header
    %s11 = sphi 0, %s15
    %p12 = scmp.ge.s32.totalorder %s11, 4
    %s18 = sphi 0, %s30
    %s19 = sphi 0, %s26
    %s20 = sphi 0, %s18
    %s21 = sphi 0, %s19
    %s22 = sphi 0, %s20
    %s23 = sphi 0, %s21
    %s35 = sphi 0, %s37
    %s38 = sphi 0, %s35
    %s39 = sphi 0, %s38
    %s55 = sphi 0, %s39
    %s59 = sphi 0, %s59
    %s61 = sphi 0, %s59
    %s62 = sphi 0, %s61
    %s76 = sphi 0, %s62
    %s80 = sphi 0, %s80
    %s82 = sphi 0, %s80
    %s83 = sphi 0, %s82
    %s97 = sphi 0, %s83
    %s101 = sphi 0, %s101
    %s103 = sphi 0, %s101
    %s104 = sphi 0, %s103
    %s118 = sphi 0, %s104
    %s122 = sphi 0, %s122
    %s124 = sphi 0, %s122
    %s125 = sphi 0, %s124
    %s139 = sphi 0, %s125
    %s147 = sphi 0, %s149
    %s150 = sphi 0, %s147
    %s151 = sphi 0, %s150
    %s167 = sphi 0, %s151
  $region4: #{mlp_forward.1} parent=0 // loop_header_branch
    %14 = sbr.rel (%p12) target = $region8
  $region5: #{mlp_forward.1} parent=0 // loop_body
    %s16 = ssub.s32 %s11, 1
    %s17 = ssub.s32 %s11, 2
    %s24 = sadd.s32 1, %s19
    %p25 = scmp.ge.s32.totalorder %s24, 1
    %s26 = scalar_select %p25, 0, %s24
    %s27 = sadd.s32 1, %s18
    %s28 = scalar_select %p25, %s27, %s18
    %p29 = scmp.ge.s32.totalorder %s28, 2
    %s30 = scalar_select %p29, 0, %s28
    %s31 = ssub.s32 %s18, %s30
    %s32 = ssub.s32 %s19, %s26
    %s33 = sor.u32 %s31, %s32
    %p34 = scmp.eq.s32.totalorder %s33, 0
    %s36 = sadd.s32 %s35, 1
    %s37 = scalar_select %p34, %s35, %s36
    %p40 = pneg %p34
    %p41 = scmp.eq.s32.totalorder %s11, 1
    %p42 = por %p40, %p41
    %p43 = scmp.ne.s32.totalorder %s35, %s38
    %p44 = scmp.eq.s32.totalorder %s11, 0
    %p45 = por %p43, %p44
    %p46 = scmp.ne.s32.totalorder %s35, %s38
    %p47 = scmp.eq.s32.totalorder %s16, 1
    %p48 = por %p46, %p47
    %p49 = scmp.ne.s32.totalorder %s38, %s39
    %p50 = scmp.eq.s32.totalorder %s16, 0
    %p51 = por %p49, %p50
    %p52 = scmp.ne.s32.totalorder %s38, %s39
    %p53 = scmp.eq.s32.totalorder %s17, 1
    %p54 = por %p52, %p53
    %p56 = scmp.ne.s32.totalorder %s39, %s55
    %p57 = scmp.eq.s32.totalorder %s17, 0
    %p58 = por %p56, %p57
    %s60 = sadd.s32 %s59, 1
    %p63 = scmp.eq.s32.totalorder %s11, 1
    %p64 = scmp.ne.s32.totalorder %s59, %s61
    %p65 = scmp.eq.s32.totalorder %s11, 0
    %p66 = por %p64, %p65
    %p67 = scmp.ne.s32.totalorder %s59, %s61
    %p68 = scmp.eq.s32.totalorder %s16, 1
    %p69 = por %p67, %p68
    %p70 = scmp.ne.s32.totalorder %s61, %s62
    %p71 = scmp.eq.s32.totalorder %s16, 0
    %p72 = por %p70, %p71
    %p73 = scmp.ne.s32.totalorder %s61, %s62
    %p74 = scmp.eq.s32.totalorder %s17, 1
    %p75 = por %p73, %p74
    %p77 = scmp.ne.s32.totalorder %s62, %s76
    %p78 = scmp.eq.s32.totalorder %s17, 0
    %p79 = por %p77, %p78
    %s81 = sadd.s32 %s80, 1
    %p84 = scmp.eq.s32.totalorder %s11, 1
    %p85 = scmp.ne.s32.totalorder %s80, %s82
    %p86 = scmp.eq.s32.totalorder %s11, 0
    %p87 = por %p85, %p86
    %p88 = scmp.ne.s32.totalorder %s80, %s82
    %p89 = scmp.eq.s32.totalorder %s16, 1
    %p90 = por %p88, %p89
    %p91 = scmp.ne.s32.totalorder %s82, %s83
    %p92 = scmp.eq.s32.totalorder %s16, 0
    %p93 = por %p91, %p92
    %p94 = scmp.ne.s32.totalorder %s82, %s83
    %p95 = scmp.eq.s32.totalorder %s17, 1
    %p96 = por %p94, %p95
    %p98 = scmp.ne.s32.totalorder %s83, %s97
    %p99 = scmp.eq.s32.totalorder %s17, 0
    %p100 = por %p98, %p99
    %s102 = sadd.s32 %s101, 1
    %p105 = scmp.eq.s32.totalorder %s11, 1
    %p106 = scmp.ne.s32.totalorder %s101, %s103
    %p107 = scmp.eq.s32.totalorder %s11, 0
    %p108 = por %p106, %p107
    %p109 = scmp.ne.s32.totalorder %s101, %s103
    %p110 = scmp.eq.s32.totalorder %s16, 1
    %p111 = por %p109, %p110
    %p112 = scmp.ne.s32.totalorder %s103, %s104
    %p113 = scmp.eq.s32.totalorder %s16, 0
    %p114 = por %p112, %p113
    %p115 = scmp.ne.s32.totalorder %s103, %s104
    %p116 = scmp.eq.s32.totalorder %s17, 1
    %p117 = por %p115, %p116
    %p119 = scmp.ne.s32.totalorder %s104, %s118
    %p120 = scmp.eq.s32.totalorder %s17, 0
    %p121 = por %p119, %p120
    %s123 = sadd.s32 %s122, 1
    %p126 = scmp.eq.s32.totalorder %s11, 1
    %p127 = scmp.ne.s32.totalorder %s122, %s124
    %p128 = scmp.eq.s32.totalorder %s11, 0
    %p129 = por %p127, %p128
    %p130 = scmp.ne.s32.totalorder %s122, %s124
    %p131 = scmp.eq.s32.totalorder %s16, 1
    %p132 = por %p130, %p131
    %p133 = scmp.ne.s32.totalorder %s124, %s125
    %p134 = scmp.eq.s32.totalorder %s16, 0
    %p135 = por %p133, %p134
    %p136 = scmp.ne.s32.totalorder %s124, %s125
    %p137 = scmp.eq.s32.totalorder %s17, 1
    %p138 = por %p136, %p137
    %p140 = scmp.ne.s32.totalorder %s125, %s139
    %p141 = scmp.eq.s32.totalorder %s17, 0
    %p142 = por %p140, %p141
    %s143 = ssub.s32 %s18, %s30
    %s144 = ssub.s32 %s19, %s26
    %s145 = sor.u32 %s143, %s144
    %p146 = scmp.eq.s32.totalorder %s145, 0
    %s148 = sadd.s32 %s147, 1
    %s149 = scalar_select %p146, %s147, %s148
    %p152 = pneg %p146
    %p153 = scmp.eq.s32.totalorder %s11, 1
    %p154 = por %p152, %p153
    %p155 = scmp.ne.s32.totalorder %s147, %s150
    %p156 = scmp.eq.s32.totalorder %s11, 0
    %p157 = por %p155, %p156
    %p158 = scmp.ne.s32.totalorder %s147, %s150
    %p159 = scmp.eq.s32.totalorder %s16, 1
    %p160 = por %p158, %p159
    %p161 = scmp.ne.s32.totalorder %s150, %s151
    %p162 = scmp.eq.s32.totalorder %s16, 0
    %p163 = por %p161, %p162
    %p164 = scmp.ne.s32.totalorder %s150, %s151
    %p165 = scmp.eq.s32.totalorder %s17, 1
    %p166 = por %p164, %p165
    %p168 = scmp.ne.s32.totalorder %s151, %s167
    %p169 = scmp.eq.s32.totalorder %s17, 0
    %p170 = por %p168, %p169
    %p171 = scmp.le.s32.totalorder 1, %s11
    %p172 = scmp.lt.s32.totalorder %s11, 3
    %p173 = pnand %p171, %p172
    %p174 = pneg %p173
    // Predicated region
    $region9: #{mlp_forward.1} parent=5 // pred_check
      _
    $region10: #{mlp_forward.1} parent=5 // pred_check_branch
      %176 = sbr.rel (%p173) target = $region12
    $region11: #{mlp_forward.1} parent=5 // pred_region
      %s177 = ssub.s32 %s11, 1
      // Predicated region
      $region13: #{mlp_forward.1} parent=11 // pred_check
        %p178 = pneg %p72
      $region14: #{mlp_forward.1} parent=11 // pred_check_branch
        %180 = sbr.rel (%p178) target = $region16
      $region15: #{mlp_forward.1} parent=11 // pred_region
        _
      $region16: #{mlp_forward.1} parent=11 // pred_fallthru
        _
      // Predicated region
      $region17: #{mlp_forward.1} parent=11 // pred_check
        %p181 = pneg %p93
      $region18: #{mlp_forward.1} parent=11 // pred_check_branch
        %183 = sbr.rel (%p181) target = $region20
      $region19: #{mlp_forward.1} parent=11 // pred_region
        _
      $region20: #{mlp_forward.1} parent=11 // pred_fallthru
        _
      // Predicated region
      $region21: #{mlp_forward.1} parent=11 // pred_check
        %p184 = pneg %p114
      $region22: #{mlp_forward.1} parent=11 // pred_check_branch
        %186 = sbr.rel (%p184) target = $region24
      $region23: #{mlp_forward.1} parent=11 // pred_region
        _
      $region24: #{mlp_forward.1} parent=11 // pred_fallthru
        _
      // Predicated region
      $region25: #{mlp_forward.1} parent=11 // pred_check
        %p187 = pneg %p135
      $region26: #{mlp_forward.1} parent=11 // pred_check_branch
        %189 = sbr.rel (%p187) target = $region28
      $region27: #{mlp_forward.1} parent=11 // pred_region
        _
      $region28: #{mlp_forward.1} parent=11 // pred_fallthru
        _
    $region12: #{mlp_forward.1} parent=5 // pred_fallthru
      _
    %p190 = scmp.lt.s32.totalorder %s11, 2
    // Predicated region
    $region29: #{mlp_forward.1} parent=5 // pred_check
      %p191 = pneg %p190
    $region30: #{mlp_forward.1} parent=5 // pred_check_branch
      %193 = sbr.rel (%p191) target = $region32
    $region31: #{mlp_forward.1} parent=5 // pred_region
      // Predicated region
      $region33: #{mlp_forward.1} parent=31 // pred_check
        %p194 = pneg %p45
      $region34: #{mlp_forward.1} parent=31 // pred_check_branch
        %196 = sbr.rel (%p194) target = $region36
      $region35: #{mlp_forward.1} parent=31 // pred_region
        %s197 = smul.u32 2, %s19
        %p198 = scmp.lt.s32.totalorder %s18, 1
        %s199 = scalar_select %p198, %s18, 1
        %p200 = scmp.lt.s32.totalorder %s197, 1
        %s201 = scalar_select %p200, %s197, 1
        %s202 = smul.addr %s199, 2
        %s203 = sadd.s32 %s201, %s202
        %s204 = smul.addr %s203, 4
        %s205 = scalar_lea.vmem %s0, %s204
        %s206 = smul.u32 2, %s19
      $region36: #{mlp_forward.1} parent=31 // pred_fallthru
        _
    $region32: #{mlp_forward.1} parent=5 // pred_fallthru
      _
    %p207 = scmp.le.s32.totalorder 1, %s11
    %p208 = scmp.lt.s32.totalorder %s11, 3
    %p209 = pnand %p207, %p208
    %p210 = pneg %p209
    // Predicated region
    $region37: #{mlp_forward.1} parent=5 // pred_check
      _
    $region38: #{mlp_forward.1} parent=5 // pred_check_branch
      %212 = sbr.rel (%p209) target = $region40
    $region39: #{mlp_forward.1} parent=5 // pred_region
      %s213 = ssub.s32 %s11, 1
      %s214 = smul.u32 2, %s21
      %p215 = scmp.lt.s32.totalorder %s20, 1
      %s216 = scalar_select %p215, %s20, 1
      %p217 = scmp.lt.s32.totalorder %s214, 1
      %s218 = scalar_select %p217, %s214, 1
      %s219 = smul.addr %s216, 2
      %s220 = sadd.s32 %s218, %s219
      %s221 = smul.addr %s220, 4
      %s222 = scalar_lea.vmem %s0, %s221
      %p223 = pneg %p51
      %p224 = pneg %p48
      %p225 = pneg %p72
      %p226 = pneg %p69
      %p227 = pneg %p93
      %p228 = pneg %p90
      %p229 = pneg %p114
      %p230 = pneg %p111
      %p231 = pneg %p135
      %p232 = pneg %p132
      %p233 = pneg %p163
      %p234 = pneg %p160
      %s235 = smul.u32 2, %s21
      %p236 = scmp.lt.s32.totalorder %s20, 1
      %s237 = scalar_select %p236, %s20, 1
      %p238 = scmp.lt.s32.totalorder %s235, 1
      %s239 = scalar_select %p238, %s235, 1
      %s240 = smul.addr %s237, 2
      %s241 = sadd.s32 %s239, %s240
      %s242 = smul.addr %s241, 4
      %s243 = scalar_lea.vmem %s5, %s242
      %s244 = smul.u32 2, %s21
      %p245 = scmp.lt.s32.totalorder %s20, 1
      %s246 = scalar_select %p245, %s20, 1
      %p247 = scmp.lt.s32.totalorder %s244, 1
      %s248 = scalar_select %p247, %s244, 1
      %s249 = smul.addr %s246, 2
      %s250 = sadd.s32 %s248, %s249
      %s251 = smul.addr %s250, 4
      %s252 = scalar_lea.vmem %s0, %s251
      %s253 = smul.u32 2, %s21
      %s254 = smul.u32 2, %s21
      %p255 = scmp.lt.s32.totalorder %s20, 1
      %s256 = scalar_select %p255, %s20, 1
      %p257 = scmp.lt.s32.totalorder %s254, 1
      %s258 = scalar_select %p257, %s254, 1
      %s259 = smul.addr %s256, 2
      %s260 = sadd.s32 %s258, %s259
      %s261 = smul.addr %s260, 4
      %s262 = scalar_lea.vmem %s5, %s261
      %s263 = smul.u32 2, %s21
      %v264 = vld [vmem:[%s252] sm:$0xff]
      %v265 = vld [vmem:[%s1] sm:$0xff]
      %v266 = vld [vmem:[%s1 + $0x8] sm:$0xff]
      %v267 = vld [vmem:[%s1 + $0x10] sm:$0xff]
      %v268 = vld [vmem:[%s1 + $0x18] sm:$0xff]
      %v269 = vld [vmem:[%s2] sm:$0xff]
      %v270 = vld [vmem:[%s2 + $0x8] sm:$0xff]
      %v271 = vld [vmem:[%s2 + $0x10] sm:$0xff]
      %v272 = vld [vmem:[%s2 + $0x18] sm:$0xff]
      %274 = vset.pattern.permute.xlu0 0
      %275 = vperm.xlu0 %274, %v269
      %v276 = vpop.permute.xlu0 %275
      %279 = vset.pattern.permute.xlu0 0
      %280 = vperm.xlu0 %279, %v270
      %v281 = vpop.permute.xlu0 %280
      %284 = vset.pattern.permute.xlu0 0
      %285 = vperm.xlu0 %284, %v271
      %v286 = vpop.permute.xlu0 %285
      %289 = vset.pattern.permute.xlu0 0
      %290 = vperm.xlu0 %289, %v272
      %v291 = vpop.permute.xlu0 %290
      %294 = vst [vmem:[#allocation1] ss:$2 sm:$0xff] %v264
      %v295 = vld.sshfl [vmem:[#allocation1] sm:$0xff pattern:$0x75316420]
      %v296 = vld.sshfl [vmem:[#allocation1 + $0x8] sm:$0xff pattern:$0x75316420]
      %vm297 = vcmask 31744
      %v299 = vsel %vm297, %v265, 0
      %v302 = vsel %vm297, %v266, 0
      %v305 = vsel %vm297, %v267, 0
      %v308 = vsel %vm297, %v268, 0
      %vm310 = vcmask 1043456
      %v311 = vsel %vm310, %v295, 0
      %v313 = vsel %vm310, %v296, 0
      %315 = vmatpush.msra.mxu0 0.0
      %316 = vmatpush.msra.mxu0 0.0
      %317 = vmatpush.msra.mxu0 0.0
      %318 = vmatpush.msra.mxu0 0.0
      %319 = vmatpush.msra.mxu0 0.0
      %320 = vmatpush.msra.mxu0 0.0
      %321 = vmatpush.msra.mxu0 0.0
      %322 = vmatpush.msra.mxu0 0.0
      %323 = vmatpush.msra.mxu0 0.0
      %324 = vmatpush.msra.mxu0 0.0
      %325 = vmatpush.msra.mxu0 0.0
      %326 = vmatpush.msra.mxu0 0.0
      %327 = vmatpush.msra.mxu0 0.0
      %328 = vmatpush.msra.mxu0 0.0
      %329 = vmatpush.msra.mxu0 0.0
      %330 = vmatpush.msra.mxu0 %v311
      %331 = vmatmul.f32.gmra.mxu0 %v299
      %v332 = vpop.f32.mrf.mxu0
      %v333 = vadd.f32 %v276, %v332
      %334 = vmatmul.f32.gmra.mxu0 %v302
      %v335 = vpop.f32.mrf.mxu0
      %v336 = vadd.f32 %v281, %v335
      %337 = vmatmul.f32.gmra.mxu0 %v305
      %v338 = vpop.f32.mrf.mxu0
      %v339 = vadd.f32 %v286, %v338
      %340 = vmatmul.f32.gmra.mxu0 %v308
      %v341 = vpop.f32.mrf.mxu0
      %v342 = vadd.f32 %v291, %v341
      %343 = vdwg.mxu0
      %344 = vmatpush.msra.mxu0 0.0
      %345 = vmatpush.msra.mxu0 0.0
      %346 = vmatpush.msra.mxu0 0.0
      %347 = vmatpush.msra.mxu0 0.0
      %348 = vmatpush.msra.mxu0 0.0
      %349 = vmatpush.msra.mxu0 0.0
      %350 = vmatpush.msra.mxu0 0.0
      %351 = vmatpush.msra.mxu0 0.0
      %352 = vmatpush.msra.mxu0 0.0
      %353 = vmatpush.msra.mxu0 0.0
      %354 = vmatpush.msra.mxu0 0.0
      %355 = vmatpush.msra.mxu0 0.0
      %356 = vmatpush.msra.mxu0 0.0
      %357 = vmatpush.msra.mxu0 0.0
      %358 = vmatpush.msra.mxu0 0.0
      %359 = vmatpush.msra.mxu0 %v313
      %360 = vmatmul.f32.gmra.mxu0 %v299
      %v361 = vpop.f32.mrf.mxu0
      %v362 = vadd.f32 %v276, %v361
      %363 = vmatmul.f32.gmra.mxu0 %v302
      %v364 = vpop.f32.mrf.mxu0
      %v365 = vadd.f32 %v281, %v364
      %366 = vmatmul.f32.gmra.mxu0 %v305
      %v367 = vpop.f32.mrf.mxu0
      %v368 = vadd.f32 %v286, %v367
      %369 = vmatmul.f32.gmra.mxu0 %v308
      %v370 = vpop.f32.mrf.mxu0
      %v371 = vadd.f32 %v291, %v370
      %372 = vdwg.mxu0
      %v373 = vmul.f32 %v333, 0.5
      %v374 = vmul.f32 %v362, 0.5
      %v375 = vmul.f32 %v336, 0.5
      %v376 = vmul.f32 %v365, 0.5
      %v377 = vmul.f32 %v339, 0.5
      %v378 = vmul.f32 %v368, 0.5
      %v379 = vmul.f32 %v342, 0.5
      %v380 = vmul.f32 %v371, 0.5
      %v381 = vmul.f32 %v333, 0.044715
      %v382 = vmul.f32 %v362, 0.044715
      %v383 = vmul.f32 %v336, 0.044715
      %v384 = vmul.f32 %v365, 0.044715
      %v385 = vmul.f32 %v339, 0.044715
      %v386 = vmul.f32 %v368, 0.044715
      %v387 = vmul.f32 %v342, 0.044715
      %v388 = vmul.f32 %v371, 0.044715
      %v389 = vmul.f32 %v381, %v333
      %v390 = vmul.f32 %v382, %v362
      %v391 = vmul.f32 %v383, %v336
      %v392 = vmul.f32 %v384, %v365
      %v393 = vmul.f32 %v385, %v339
      %v394 = vmul.f32 %v386, %v368
      %v395 = vmul.f32 %v387, %v342
      %v396 = vmul.f32 %v388, %v371
      %v397 = vmul.f32 %v389, %v333
      %v398 = vmul.f32 %v390, %v362
      %v399 = vmul.f32 %v391, %v336
      %v400 = vmul.f32 %v392, %v365
      %v401 = vmul.f32 %v393, %v339
      %v402 = vmul.f32 %v394, %v368
      %v403 = vmul.f32 %v395, %v342
      %v404 = vmul.f32 %v396, %v371
      %v405 = vadd.f32 %v333, %v397
      %v406 = vadd.f32 %v362, %v398
      %v407 = vadd.f32 %v336, %v399
      %v408 = vadd.f32 %v365, %v400
      %v409 = vadd.f32 %v339, %v401
      %v410 = vadd.f32 %v368, %v402
      %v411 = vadd.f32 %v342, %v403
      %v412 = vadd.f32 %v371, %v404
      %v413 = vmul.f32 %v405, 0.7978846
      %v414 = vmul.f32 %v406, 0.7978846
      %v415 = vmul.f32 %v407, 0.7978846
      %v416 = vmul.f32 %v408, 0.7978846
      %v417 = vmul.f32 %v409, 0.7978846
      %v418 = vmul.f32 %v410, 0.7978846
      %v419 = vmul.f32 %v411, 0.7978846
      %v420 = vmul.f32 %v412, 0.7978846
      %v421 = vtanh.pop %v413
      %v422 = vtanh.pop %v414
      %v423 = vtanh.pop %v415
      %v424 = vtanh.pop %v416
      %v425 = vtanh.pop %v417
      %v426 = vtanh.pop %v418
      %v427 = vtanh.pop %v419
      %v428 = vtanh.pop %v420
      %v429 = vadd.f32 %v421, 1.0
      %v430 = vadd.f32 %v422, 1.0
      %v431 = vadd.f32 %v423, 1.0
      %v432 = vadd.f32 %v424, 1.0
      %v433 = vadd.f32 %v425, 1.0
      %v434 = vadd.f32 %v426, 1.0
      %v435 = vadd.f32 %v427, 1.0
      %v436 = vadd.f32 %v428, 1.0
      %v437 = vmul.f32 %v373, %v429
      %v438 = vmul.f32 %v374, %v430
      %v439 = vmul.f32 %v375, %v431
      %v440 = vmul.f32 %v376, %v432
      %v441 = vmul.f32 %v377, %v433
      %v442 = vmul.f32 %v378, %v434
      %v443 = vmul.f32 %v379, %v435
      %v444 = vmul.f32 %v380, %v436
      %v445 = vld [vmem:[%s3] sm:$0xf]
      %v446 = vld [vmem:[%s4] sm:$0xf]
      %448 = vset.pattern.permute.xlu0 0
      %449 = vperm.xlu0 %448, %v446
      %v450 = vpop.permute.xlu0 %449
      %vm452 = vcmask 261120
      %v454 = vsel %vm452, %v445, 0
      %456 = vmatpush.msra.mxu0 0.0
      %457 = vmatpush.msra.mxu0 0.0
      %458 = vmatpush.msra.mxu0 0.0
      %459 = vmatpush.msra.mxu0 0.0
      %460 = vmatpush.msra.mxu0 0.0
      %461 = vmatpush.msra.mxu0 0.0
      %462 = vmatpush.msra.mxu0 0.0
      %463 = vmatpush.msra.mxu0 0.0
      %464 = vmatpush.msra.mxu0 0.0
      %465 = vmatpush.msra.mxu0 0.0
      %466 = vmatpush.msra.mxu0 0.0
      %467 = vmatpush.msra.mxu0 0.0
      %468 = vmatpush.msra.mxu0 %v443
      %469 = vmatpush.msra.mxu0 %v441
      %470 = vmatpush.msra.mxu0 %v439
      %471 = vmatpush.msra.mxu0 %v437
      %472 = vmatmul.f32.gmra.mxu0 %v454
      %v473 = vpop.f32.mrf.mxu0
      %v474 = vadd.f32 %v450, %v473
      %475 = vdwg.mxu0
      %476 = vmatpush.msra.mxu0 0.0
      %477 = vmatpush.msra.mxu0 0.0
      %478 = vmatpush.msra.mxu0 0.0
      %479 = vmatpush.msra.mxu0 0.0
      %480 = vmatpush.msra.mxu0 0.0
      %481 = vmatpush.msra.mxu0 0.0
      %482 = vmatpush.msra.mxu0 0.0
      %483 = vmatpush.msra.mxu0 0.0
      %484 = vmatpush.msra.mxu0 0.0
      %485 = vmatpush.msra.mxu0 0.0
      %486 = vmatpush.msra.mxu0 0.0
      %487 = vmatpush.msra.mxu0 0.0
      %488 = vmatpush.msra.mxu0 %v444
      %489 = vmatpush.msra.mxu0 %v442
      %490 = vmatpush.msra.mxu0 %v440
      %491 = vmatpush.msra.mxu0 %v438
      %492 = vmatmul.f32.gmra.mxu0 %v454
      %v493 = vpop.f32.mrf.mxu0
      %v494 = vadd.f32 %v450, %v493
      %495 = vdwg.mxu0
      %v498 = vrot.slane %v494, 4
      %v499 = vsel %vm310, %v474, %v498
      %501 = vst [vmem:[%s262] sm:$0xff] %v499
      %s502 = smul.u32 2, %s21
      %p503 = scmp.lt.s32.totalorder %s20, 1
      %s504 = scalar_select %p503, %s20, 1
      %p505 = scmp.lt.s32.totalorder %s502, 1
      %s506 = scalar_select %p505, %s502, 1
      %s507 = smul.addr %s504, 2
      %s508 = sadd.s32 %s506, %s507
      %s509 = smul.addr %s508, 4
      %s510 = scalar_lea.vmem %s5, %s509
      // Predicated region
      $region41: #{mlp_forward.1} parent=39 // pred_check
        %p511 = pneg %p160
      $region42: #{mlp_forward.1} parent=39 // pred_check_branch
        %513 = sbr.rel (%p511) target = $region44
      $region43: #{mlp_forward.1} parent=39 // pred_region
        %s514 = smul.u32 2, %s21
      $region44: #{mlp_forward.1} parent=39 // pred_fallthru
        _
    $region40: #{mlp_forward.1} parent=5 // pred_fallthru
      _
    %p515 = scmp.le.s32.totalorder 2, %s11
    // Predicated region
    $region45: #{mlp_forward.1} parent=5 // pred_check
      %p516 = pneg %p515
    $region46: #{mlp_forward.1} parent=5 // pred_check_branch
      %518 = sbr.rel (%p516) target = $region48
    $region47: #{mlp_forward.1} parent=5 // pred_region
      %s519 = ssub.s32 %s11, 2
      // Predicated region
      $region49: #{mlp_forward.1} parent=47 // pred_check
        %p520 = pneg %p166
      $region50: #{mlp_forward.1} parent=47 // pred_check_branch
        %522 = sbr.rel (%p520) target = $region52
      $region51: #{mlp_forward.1} parent=47 // pred_region
        %s523 = smul.u32 2, %s23
        %p524 = scmp.lt.s32.totalorder %s22, 1
        %s525 = scalar_select %p524, %s22, 1
        %p526 = scmp.lt.s32.totalorder %s523, 1
        %s527 = scalar_select %p526, %s523, 1
        %s528 = smul.addr %s525, 2
        %s529 = sadd.s32 %s527, %s528
        %s530 = smul.addr %s529, 4
        %s531 = scalar_lea.vmem %s5, %s530
      $region52: #{mlp_forward.1} parent=47 // pred_fallthru
        _
    $region48: #{mlp_forward.1} parent=5 // pred_fallthru
      _
  $region6: #{mlp_forward.1} parent=0 // loop_footer
    %s15 = sadd.s32 1, %s11
  $region7: #{mlp_forward.1} parent=0 // loop_footer_branch
    %10 = sbr.rel target = $region3
  $region8: #{mlp_forward.1} parent=0 // loop_exit
    _

</llo_original>
